<compile_context>
chip_gen: v7x
topology: tpu7x:2x2x1
jax: 0.10.0
libtpu: 0.0.40
codegen_flags: <defaults>
</compile_context>

<pallas_src>
import functools

import jax
import jax.numpy as jnp
from jax import lax
from jax.experimental import pallas as pl
from jax.experimental.pallas import tpu as pltpu


def _lstm_kernel(x2d_ref, wih_ref, whh_ref, b_ref, h0_ref, c0_ref,
                 y_ref, cn_ref,
                 xproj_sc, h_sc, c_sc,
                 *, hidden_size, batch_pad, chunk_t, pack, unroll):
    H = hidden_size
    Bp = batch_pad
    P = pack
    ci = pl.program_id(0)

    # Seed the persistent (across time-chunks) h/c carry on the first chunk.
    @pl.when(ci == 0)
    def _():
        h_sc[...] = h0_ref[...].astype(jnp.float32)
        c_sc[...] = c0_ref[...].astype(jnp.float32)

    # Chunk prologue: hoisted time-invariant input projection — one
    # (Tc*Bp, I) x (I, 4H) MXU matmul (bf16 in, f32 accumulate) + folded bias.
    xproj_sc[...] = (
        jnp.dot(x2d_ref[...], wih_ref[...], preferred_element_type=jnp.float32)
        + b_ref[...].astype(jnp.float32))

    w_dtype = whh_ref.dtype

    def group_step(g, carry):
        h, c = carry                                  # f32, vreg-resident carries
        packed = []
        for p in range(P):                            # static inner unroll by P
            row = pl.multiple_of(g * (P * Bp) + p * Bp, Bp)
            gates = (xproj_sc[pl.ds(row, Bp), :]
                     + jnp.dot(h.astype(w_dtype), whh_ref[...],
                               preferred_element_type=jnp.float32))   # (Bp, 4H) f32
            # Gate order was permuted to (i, f, o, g) in the wrapper so sigmoid
            # covers one contiguous 3H lane slice and tanh only H lanes.
            sig = jax.nn.sigmoid(gates[:, :3 * H])
            i_g = sig[:, 0 * H:1 * H]
            f_g = sig[:, 1 * H:2 * H]
            o_g = sig[:, 2 * H:3 * H]
            g_g = jnp.tanh(gates[:, 3 * H:4 * H])
            c = f_g * c + i_g * g_g
            h = o_g * jnp.tanh(c)
            packed.append(h)
        # Lane-dense writeback: P consecutive timesteps form one (Bp, P*H) row.
        out_row = packed[0] if P == 1 else jnp.concatenate(packed, axis=-1)
        y_ref[g] = out_row.astype(y_ref.dtype)
        return (h, c)

    n_groups = chunk_t // P
    h_fin, c_fin = lax.fori_loop(0, n_groups, group_step,
                                 (h_sc[...], c_sc[...]), unroll=unroll)

    # Persist the carry for the next chunk and keep cn up to date (only the
    # last chunk's value is written back to HBM — constant output index map).
    h_sc[...] = h_fin
    c_sc[...] = c_fin
    cn_ref[...] = c_fin.astype(cn_ref.dtype)


def lstm_forward_pallas(x, hx, cx, w_ih, w_hh, b_ih, b_hh, *,
                        weight_dtype=jnp.bfloat16, chunk_t=None, unroll=2):
    """Single-layer unidirectional LSTM forward (matches torch.nn.LSTM).

    Args:
      x:  (T, B, I) float32   (batch_first=False convention)
      hx: (1, B, H), cx: (1, B, H)
      w_ih: (4H, I), w_hh: (4H, H), b_ih: (4H,), b_hh: (4H,)  (PyTorch layout)
      weight_dtype: dtype for weights / x / h at the MXU (f32 accumulation).
      chunk_t: timesteps per grid step (must divide T); None -> auto.
      unroll: fori_loop unroll factor for the recurrence groups.

    Returns:
      (y, (hn, cn)) with y: (T, B, H), hn/cn: (1, B, H).
    """
    T, B, I = x.shape
    H = hx.shape[-1]
    out_dtype = x.dtype

    # Pad batch to a full f32 sublane group (8): padded rows compute bounded
    # garbage independently and are sliced off; real rows are unaffected.
    Bp = max(8, -(-B // 8) * 8)

    # Lane-pack factor: P consecutive timesteps per 128-lane output row.
    P = 128 // H if (H < 128 and 128 % H == 0) else 1

    def _largest_chunk(p):
        for cand in range(min(T, 64), 0, -1):
            if T % cand == 0 and cand % p == 0:
                return cand
        return None

    if chunk_t is not None:
        assert T % chunk_t == 0, "chunk_t must divide T"
        Tc = chunk_t
        if Tc % P != 0:
            P = 1                     # fall back to per-step (masked) y stores
    else:
        Tc = _largest_chunk(P)
        if Tc is None:
            P = 1
            Tc = _largest_chunk(1)
    num_chunks = T // Tc

    # Glue (trace-time, zero kernel cost): transpose weights, permute gate
    # blocks (i,f,g,o) -> (i,f,o,g) so sigmoid/tanh split is a contiguous lane
    # slice, fold the two biases, cast MXU operands to weight_dtype.
    def _to_ifog(w):
        i_b, f_b, g_b, o_b = jnp.split(w, 4, axis=-1)
        return jnp.concatenate([i_b, f_b, o_b, g_b], axis=-1)

    wih_t = _to_ifog(jnp.asarray(w_ih).T).astype(weight_dtype)         # (I, 4H)
    whh_t = _to_ifog(jnp.asarray(w_hh).T).astype(weight_dtype)         # (H, 4H)
    bias = _to_ifog((jnp.asarray(b_ih, jnp.float32)
                     + jnp.asarray(b_hh, jnp.float32)).reshape(1, 4 * H))

    x_p = (jnp.pad(x, ((0, 0), (0, Bp - B), (0, 0)))
              .reshape(T * Bp, I).astype(weight_dtype))
    h0 = jnp.pad(hx[0], ((0, Bp - B), (0, 0))).astype(jnp.float32)     # (Bp, H)
    c0 = jnp.pad(cx[0], ((0, Bp - B), (0, 0))).astype(jnp.float32)     # (Bp, H)

    kernel = functools.partial(
        _lstm_kernel, hidden_size=H, batch_pad=Bp, chunk_t=Tc, pack=P,
        unroll=unroll)

    # Scoped-VMEM budget from the actual block + scratch footprint (generous).
    wbytes = jnp.dtype(weight_dtype).itemsize
    blk_bytes = 2 * (Tc * Bp * I * wbytes + Tc * Bp * H * 4)           # x/y streams
    fixed_bytes = 2 * ((I + H) * 4 * H * wbytes + 4 * H * 4 + 3 * Bp * H * 4)
    scratch_bytes = Tc * Bp * 4 * H * 4 + 2 * Bp * H * 4
    vmem_limit = int(min(max(2 * (blk_bytes + fixed_bytes + scratch_bytes)
                             + (4 << 20), 16 << 20), 100 << 20))

    y_p, cn_p = pl.pallas_call(
        kernel,
        out_shape=(
            jax.ShapeDtypeStruct((T // P, Bp, P * H), out_dtype),
            jax.ShapeDtypeStruct((Bp, H), out_dtype),
        ),
        grid_spec=pltpu.PrefetchScalarGridSpec(
            num_scalar_prefetch=0,
            grid=(num_chunks,),                                # chunked time axis
            in_specs=[
                pl.BlockSpec((Tc * Bp, I), lambda i: (i, 0)),      # x chunk
                pl.BlockSpec((I, 4 * H), lambda i: (0, 0)),        # W_ih^T (ifog)
                pl.BlockSpec((H, 4 * H), lambda i: (0, 0)),        # W_hh^T (ifog)
                pl.BlockSpec((1, 4 * H), lambda i: (0, 0)),        # folded bias
                pl.BlockSpec((Bp, H), lambda i: (0, 0)),           # h0
                pl.BlockSpec((Bp, H), lambda i: (0, 0)),           # c0
            ],
            out_specs=[
                pl.BlockSpec((Tc // P, Bp, P * H), lambda i: (i, 0, 0)),  # y chunk
                pl.BlockSpec((Bp, H), lambda i: (0, 0)),                  # cn
            ],
            scratch_shapes=[
                pltpu.VMEM((Tc * Bp, 4 * H), jnp.float32),     # chunk xproj
                pltpu.VMEM((Bp, H), jnp.float32),              # h carry (chunks)
                pltpu.VMEM((Bp, H), jnp.float32),              # c carry (chunks)
            ],
        ),
        compiler_params=pltpu.CompilerParams(
            dimension_semantics=("arbitrary",),                # sequential recurrence
            vmem_limit_bytes=vmem_limit,
        ),
    )(x_p, wih_t, whh_t, bias, h0, c0)

    # Un-pack the lane-dense y layout back to (T, B, H).
    y = (y_p.reshape(T // P, Bp, P, H)
             .transpose(0, 2, 1, 3)
             .reshape(T, Bp, H))[:, :B, :]
    cn = cn_p[:B]
    hn = y[-1]                                                 # final h (exact in f32)
    return y, (hn[None, ...], cn[None, ...])


def module_wrapper_ignores_2nd_arg_lstm(x, hx, cx, params, dummy_arg=None,
                                        **kwargs):
    """JAX/Pallas equivalent of ModuleWrapperIgnores2ndArg_lstm.forward."""
    assert dummy_arg is not None, "dummy_arg is required but was None"
    w_ih, w_hh, b_ih, b_hh = params
    return lstm_forward_pallas(x, hx, cx, w_ih, w_hh, b_ih, b_hh, **kwargs)


def _lstm_reference(x, hx, cx, w_ih, w_hh, b_ih, b_hh):
    """Pure-JAX reference (PyTorch gate order) for correctness checking."""
    H = hx.shape[-1]

    def step(carry, x_t):
        h, c = carry
        gates = x_t @ w_ih.T + h @ w_hh.T + b_ih + b_hh
        i = jax.nn.sigmoid(gates[:, 0 * H:1 * H])
        f = jax.nn.sigmoid(gates[:, 1 * H:2 * H])
        g = jnp.tanh(gates[:, 2 * H:3 * H])
        o = jax.nn.sigmoid(gates[:, 3 * H:4 * H])
        c = f * c + i * g
        h = o * jnp.tanh(c)
        return (h, c), h

    (hn, cn), ys = jax.lax.scan(step, (hx[0], cx[0]), x)
    return ys, (hn[None], cn[None])


if __name__ == "__main__":
    # Small shapes consistent with an nn.LSTM(input_size=16, hidden_size=32).
    T, B, I, H = 8, 2, 16, 32

    key = jax.random.PRNGKey(0)
    kx, kh, kc, k1, k2, k3, k4 = jax.random.split(key, 7)

    # Deterministic synthetic parameters (PyTorch-style U(-1/sqrt(H), 1/sqrt(H))).
    bound = 1.0 / (H ** 0.5)
    w_ih = jax.random.uniform(k1, (4 * H, I), jnp.float32, -bound, bound)
    w_hh = jax.random.uniform(k2, (4 * H, H), jnp.float32, -bound, bound)
    b_ih = jax.random.uniform(k3, (4 * H,), jnp.float32, -bound, bound)
    b_hh = jax.random.uniform(k4, (4 * H,), jnp.float32, -bound, bound)

    x = jax.random.normal(kx, (T, B, I), jnp.float32)
    hx = jax.random.normal(kh, (1, B, H), jnp.float32)
    cx = jax.random.normal(kc, (1, B, H), jnp.float32)
    dummy = jnp.zeros((), jnp.float32)  # the ignored dummy_arg

    y_ref, (hn_ref, cn_ref) = _lstm_reference(x, hx, cx, w_ih, w_hh, b_ih, b_hh)

    # 1) Exact structural check: f32 weights, 4 time-chunks, per-step store path.
    y32, (hn32, cn32) = module_wrapper_ignores_2nd_arg_lstm(
        x, hx, cx, (w_ih, w_hh, b_ih, b_hh), dummy_arg=dummy,
        weight_dtype=jnp.float32, chunk_t=2)
    jax.block_until_ready((y32, hn32, cn32))
    assert jnp.allclose(y32, y_ref, atol=1e-5, rtol=1e-5)
    assert jnp.allclose(hn32, hn_ref, atol=1e-5, rtol=1e-5)
    assert jnp.allclose(cn32, cn_ref, atol=1e-5, rtol=1e-5)

    # 2) Performance configuration: bf16 MXU operands (f32 accumulate), 2
    #    time-chunks, lane-dense packed y (P = 128 // H = 4 timesteps / row).
    y, (hn, cn) = module_wrapper_ignores_2nd_arg_lstm(
        x, hx, cx, (w_ih, w_hh, b_ih, b_hh), dummy_arg=dummy,
        weight_dtype=jnp.bfloat16, chunk_t=4)
    jax.block_until_ready((y, hn, cn))
    assert jnp.allclose(y, y_ref, atol=5e-2, rtol=5e-2)
    assert jnp.allclose(hn, hn_ref, atol=5e-2, rtol=5e-2)
    assert jnp.allclose(cn, cn_ref, atol=5e-2, rtol=5e-2)

    print("KERNEL_OK")
</pallas_src>

<mosaic_0001>
module attributes {stable_mosaic.version = 11 : i64} {
  func.func @_lstm_kernel(%arg0: i32, %arg1: memref<16x16xf32, #tpu.memory_space<vmem>>, %arg2: memref<16x128xf32, #tpu.memory_space<vmem>>, %arg3: memref<32x128xf32, #tpu.memory_space<vmem>>, %arg4: memref<1x128xf32, #tpu.memory_space<vmem>>, %arg5: memref<8x32xf32, #tpu.memory_space<vmem>>, %arg6: memref<8x32xf32, #tpu.memory_space<vmem>>, %arg7: memref<2x8x32xf32, #tpu.memory_space<vmem>>, %arg8: memref<8x32xf32, #tpu.memory_space<vmem>>, %arg9: memref<16x128xf32, #tpu.memory_space<vmem>>, %arg10: memref<8x32xf32, #tpu.memory_space<vmem>>, %arg11: memref<8x32xf32, #tpu.memory_space<vmem>>) attributes {dimension_semantics = [#tpu.dimension_semantics<arbitrary>], iteration_bounds = array<i64: 4>, scalar_prefetch = 0 : i64, scratch_operands = 3 : i64, tpu.core_type = #tpu.core_type<tc>, window_params = [{transform_indices = @transform_0, window_bounds = array<i64: 16, 16>}, {pipeline_mode = #tpu.pipeline_mode<synchronous>, transform_indices = @transform_1, window_bounds = array<i64: 16, 128>}, {pipeline_mode = #tpu.pipeline_mode<synchronous>, transform_indices = @transform_2, window_bounds = array<i64: 32, 128>}, {pipeline_mode = #tpu.pipeline_mode<synchronous>, transform_indices = @transform_3, window_bounds = array<i64: 1, 128>}, {pipeline_mode = #tpu.pipeline_mode<synchronous>, transform_indices = @transform_4, window_bounds = array<i64: 8, 32>}, {pipeline_mode = #tpu.pipeline_mode<synchronous>, transform_indices = @transform_5, window_bounds = array<i64: 8, 32>}, {transform_indices = @transform_6, window_bounds = array<i64: 2, 8, 32>}, {pipeline_mode = #tpu.pipeline_mode<synchronous>, transform_indices = @transform_7, window_bounds = array<i64: 8, 32>}]} {
    %c0_i32 = arith.constant 0 : i32
    %0 = arith.cmpi eq, %arg0, %c0_i32 : i32
    %1 = arith.extui %0 : i1 to i32
    %c0_i32_0 = arith.constant 0 : i32
    %2 = arith.cmpi ne, %1, %c0_i32_0 : i32
    scf.if %2 {
      %c0_36 = arith.constant 0 : index
      %c0_37 = arith.constant 0 : index
      %71 = vector.load %arg5[%c0_36, %c0_37] : memref<8x32xf32, #tpu.memory_space<vmem>>, vector<8x32xf32>
      %c0_38 = arith.constant 0 : index
      %c0_39 = arith.constant 0 : index
      %72 = vector.load %arg10[%c0_38, %c0_39] : memref<8x32xf32, #tpu.memory_space<vmem>>, vector<8x32xf32>
      tpu.vector_store %arg10[%c0_38, %c0_39], %71 {strides = array<i32>} : memref<8x32xf32, #tpu.memory_space<vmem>>, vector<8x32xf32>,
      %c0_40 = arith.constant 0 : index
      %c0_41 = arith.constant 0 : index
      %73 = vector.load %arg6[%c0_40, %c0_41] : memref<8x32xf32, #tpu.memory_space<vmem>>, vector<8x32xf32>
      %c0_42 = arith.constant 0 : index
      %c0_43 = arith.constant 0 : index
      %74 = vector.load %arg11[%c0_42, %c0_43] : memref<8x32xf32, #tpu.memory_space<vmem>>, vector<8x32xf32>
      tpu.vector_store %arg11[%c0_42, %c0_43], %73 {strides = array<i32>} : memref<8x32xf32, #tpu.memory_space<vmem>>, vector<8x32xf32>,
    } else {
    }
    %c0 = arith.constant 0 : index
    %c0_1 = arith.constant 0 : index
    %3 = vector.load %arg1[%c0, %c0_1] : memref<16x16xf32, #tpu.memory_space<vmem>>, vector<16x16xf32>
    %c0_2 = arith.constant 0 : index
    %c0_3 = arith.constant 0 : index
    %4 = vector.load %arg2[%c0_2, %c0_3] : memref<16x128xf32, #tpu.memory_space<vmem>>, vector<16x128xf32>
    %cst = arith.constant dense<0.000000e+00> : vector<16x128xf32>
    %5 = tpu.matmul %3, %4, %cst {dimension_numbers = #tpu.dot_dimension_numbers<[1], [0], [0], [1], [0, 0, 1, 1], [], []>} : vector<16x16xf32>, vector<16x128xf32>, vector<16x128xf32> -> vector<16x128xf32>
    %c0_4 = arith.constant 0 : index
    %c0_5 = arith.constant 0 : index
    %6 = vector.load %arg4[%c0_4, %c0_5] : memref<1x128xf32, #tpu.memory_space<vmem>>, vector<1x128xf32>
    %7 = vector.broadcast %6 : vector<1x128xf32> to vector<16x128xf32>
    %8 = arith.addf %5, %7 : vector<16x128xf32>
    %c0_6 = arith.constant 0 : index
    %c0_7 = arith.constant 0 : index
    %9 = vector.load %arg9[%c0_6, %c0_7] : memref<16x128xf32, #tpu.memory_space<vmem>>, vector<16x128xf32>
    tpu.vector_store %arg9[%c0_6, %c0_7], %8 {strides = array<i32>} : memref<16x128xf32, #tpu.memory_space<vmem>>, vector<16x128xf32>,
    %c0_8 = arith.constant 0 : index
    %c0_9 = arith.constant 0 : index
    %10 = vector.load %arg10[%c0_8, %c0_9] : memref<8x32xf32, #tpu.memory_space<vmem>>, vector<8x32xf32>
    %c0_10 = arith.constant 0 : index
    %c0_11 = arith.constant 0 : index
    %11 = vector.load %arg11[%c0_10, %c0_11] : memref<8x32xf32, #tpu.memory_space<vmem>>, vector<8x32xf32>
    %c0_i32_12 = arith.constant 0 : i32
    %c8_i32 = arith.constant 8 : i32
    %12 = arith.muli %c0_i32_12, %c8_i32 : i32
    %c0_i32_13 = arith.constant 0 : i32
    %13 = arith.addi %12, %c0_i32_13 : i32
    %14 = tpu.assume_multiple %13, 8 : i32
    %15 = arith.index_cast %14 : i32 to index
    %c0_14 = arith.constant 0 : index
    %16 = vector.load %arg9[%15, %c0_14] : memref<16x128xf32, #tpu.memory_space<vmem>>, vector<8x128xf32>
    %c0_15 = arith.constant 0 : index
    %c0_16 = arith.constant 0 : index
    %17 = vector.load %arg3[%c0_15, %c0_16] : memref<32x128xf32, #tpu.memory_space<vmem>>, vector<32x128xf32>
    %cst_17 = arith.constant dense<0.000000e+00> : vector<8x128xf32>
    %18 = tpu.matmul %10, %17, %cst_17 {dimension_numbers = #tpu.dot_dimension_numbers<[1], [0], [0], [1], [0, 0, 1, 1], [], []>} : vector<8x32xf32>, vector<32x128xf32>, vector<8x128xf32> -> vector<8x128xf32>
    %19 = arith.addf %16, %18 : vector<8x128xf32>
    %20 = vector.extract_strided_slice %19 {offsets = [0, 0], sizes = [8, 96], strides = [1, 1]} : vector<8x128xf32> to vector<8x96xf32>
    %21 = arith.negf %20 : vector<8x96xf32>
    %22 = math.exp %21 : vector<8x96xf32>
    %cst_18 = arith.constant 1.000000e+00 : f32
    %23 = vector.broadcast %cst_18 : f32 to vector<8x96xf32>
    %24 = arith.addf %23, %22 : vector<8x96xf32>
    %25 = arith.divf %23, %24 : vector<8x96xf32>
    %26 = vector.extract_strided_slice %25 {offsets = [0, 0], sizes = [8, 32], strides = [1, 1]} : vector<8x96xf32> to vector<8x32xf32>
    %27 = vector.extract_strided_slice %25 {offsets = [0, 32], sizes = [8, 32], strides = [1, 1]} : vector<8x96xf32> to vector<8x32xf32>
    %28 = vector.extract_strided_slice %25 {offsets = [0, 64], sizes = [8, 32], strides = [1, 1]} : vector<8x96xf32> to vector<8x32xf32>
    %29 = vector.extract_strided_slice %19 {offsets = [0, 96], sizes = [8, 32], strides = [1, 1]} : vector<8x128xf32> to vector<8x32xf32>
    %30 = math.tanh %29 : vector<8x32xf32>
    %31 = arith.mulf %27, %11 : vector<8x32xf32>
    %32 = arith.mulf %26, %30 : vector<8x32xf32>
    %33 = arith.addf %31, %32 : vector<8x32xf32>
    %34 = math.tanh %33 : vector<8x32xf32>
    %35 = arith.mulf %28, %34 : vector<8x32xf32>
    %36 = arith.index_cast %c0_i32_12 : i32 to index
    %c0_19 = arith.constant 0 : index
    %c0_20 = arith.constant 0 : index
    %37 = vector.load %arg7[%36, %c0_19, %c0_20] : memref<2x8x32xf32, #tpu.memory_space<vmem>>, vector<1x8x32xf32>
    %38 = vector.shape_cast %37 : vector<1x8x32xf32> to vector<8x32xf32>
    %39 = vector.shape_cast %35 : vector<8x32xf32> to vector<1x8x32xf32>
    tpu.vector_store %arg7[%36, %c0_19, %c0_20], %39 {strides = array<i32>} : memref<2x8x32xf32, #tpu.memory_space<vmem>>, vector<1x8x32xf32>,
    %c1_i32 = arith.constant 1 : i32
    %c8_i32_21 = arith.constant 8 : i32
    %40 = arith.muli %c1_i32, %c8_i32_21 : i32
    %c0_i32_22 = arith.constant 0 : i32
    %41 = arith.addi %40, %c0_i32_22 : i32
    %42 = tpu.assume_multiple %41, 8 : i32
    %43 = arith.index_cast %42 : i32 to index
    %c0_23 = arith.constant 0 : index
    %44 = vector.load %arg9[%43, %c0_23] : memref<16x128xf32, #tpu.memory_space<vmem>>, vector<8x128xf32>
    %c0_24 = arith.constant 0 : index
    %c0_25 = arith.constant 0 : index
    %45 = vector.load %arg3[%c0_24, %c0_25] : memref<32x128xf32, #tpu.memory_space<vmem>>, vector<32x128xf32>
    %cst_26 = arith.constant dense<0.000000e+00> : vector<8x128xf32>
    %46 = tpu.matmul %35, %45, %cst_26 {dimension_numbers = #tpu.dot_dimension_numbers<[1], [0], [0], [1], [0, 0, 1, 1], [], []>} : vector<8x32xf32>, vector<32x128xf32>, vector<8x128xf32> -> vector<8x128xf32>
    %47 = arith.addf %44, %46 : vector<8x128xf32>
    %48 = vector.extract_strided_slice %47 {offsets = [0, 0], sizes = [8, 96], strides = [1, 1]} : vector<8x128xf32> to vector<8x96xf32>
    %49 = arith.negf %48 : vector<8x96xf32>
    %50 = math.exp %49 : vector<8x96xf32>
    %cst_27 = arith.constant 1.000000e+00 : f32
    %51 = vector.broadcast %cst_27 : f32 to vector<8x96xf32>
    %52 = arith.addf %51, %50 : vector<8x96xf32>
    %53 = arith.divf %51, %52 : vector<8x96xf32>
    %54 = vector.extract_strided_slice %53 {offsets = [0, 0], sizes = [8, 32], strides = [1, 1]} : vector<8x96xf32> to vector<8x32xf32>
    %55 = vector.extract_strided_slice %53 {offsets = [0, 32], sizes = [8, 32], strides = [1, 1]} : vector<8x96xf32> to vector<8x32xf32>
    %56 = vector.extract_strided_slice %53 {offsets = [0, 64], sizes = [8, 32], strides = [1, 1]} : vector<8x96xf32> to vector<8x32xf32>
    %57 = vector.extract_strided_slice %47 {offsets = [0, 96], sizes = [8, 32], strides = [1, 1]} : vector<8x128xf32> to vector<8x32xf32>
    %58 = math.tanh %57 : vector<8x32xf32>
    %59 = arith.mulf %55, %33 : vector<8x32xf32>
    %60 = arith.mulf %54, %58 : vector<8x32xf32>
    %61 = arith.addf %59, %60 : vector<8x32xf32>
    %62 = math.tanh %61 : vector<8x32xf32>
    %63 = arith.mulf %56, %62 : vector<8x32xf32>
    %64 = arith.index_cast %c1_i32 : i32 to index
    %c0_28 = arith.constant 0 : index
    %c0_29 = arith.constant 0 : index
    %65 = vector.load %arg7[%64, %c0_28, %c0_29] : memref<2x8x32xf32, #tpu.memory_space<vmem>>, vector<1x8x32xf32>
    %66 = vector.shape_cast %65 : vector<1x8x32xf32> to vector<8x32xf32>
    %67 = vector.shape_cast %63 : vector<8x32xf32> to vector<1x8x32xf32>
    tpu.vector_store %arg7[%64, %c0_28, %c0_29], %67 {strides = array<i32>} : memref<2x8x32xf32, #tpu.memory_space<vmem>>, vector<1x8x32xf32>,
    %c2_i32 = arith.constant 2 : i32
    %c0_30 = arith.constant 0 : index
    %c0_31 = arith.constant 0 : index
    %68 = vector.load %arg10[%c0_30, %c0_31] : memref<8x32xf32, #tpu.memory_space<vmem>>, vector<8x32xf32>
    tpu.vector_store %arg10[%c0_30, %c0_31], %63 {strides = array<i32>} : memref<8x32xf32, #tpu.memory_space<vmem>>, vector<8x32xf32>,
    %c0_32 = arith.constant 0 : index
    %c0_33 = arith.constant 0 : index
    %69 = vector.load %arg11[%c0_32, %c0_33] : memref<8x32xf32, #tpu.memory_space<vmem>>, vector<8x32xf32>
    tpu.vector_store %arg11[%c0_32, %c0_33], %61 {strides = array<i32>} : memref<8x32xf32, #tpu.memory_space<vmem>>, vector<8x32xf32>,
    %c0_34 = arith.constant 0 : index
    %c0_35 = arith.constant 0 : index
    %70 = vector.load %arg8[%c0_34, %c0_35] : memref<8x32xf32, #tpu.memory_space<vmem>>, vector<8x32xf32>
    tpu.vector_store %arg8[%c0_34, %c0_35], %61 {strides = array<i32>} : memref<8x32xf32, #tpu.memory_space<vmem>>, vector<8x32xf32>,
    return
  }
  func.func @transform_0(%arg0: i32) -> (i32, i32) {
    %c0_i32 = arith.constant 0 : i32
    %c0_i32_0 = arith.constant 0 : i32
    return %arg0, %c0_i32 : i32, i32
  }
  func.func @transform_1(%arg0: i32) -> (i32, i32) {
    %c0_i32 = arith.constant 0 : i32
    %c0_i32_0 = arith.constant 0 : i32
    %c0_i32_1 = arith.constant 0 : i32
    return %c0_i32, %c0_i32_0 : i32, i32
  }
  func.func @transform_2(%arg0: i32) -> (i32, i32) {
    %c0_i32 = arith.constant 0 : i32
    %c0_i32_0 = arith.constant 0 : i32
    %c0_i32_1 = arith.constant 0 : i32
    return %c0_i32, %c0_i32_0 : i32, i32
  }
  func.func @transform_3(%arg0: i32) -> (i32, i32) {
    %c0_i32 = arith.constant 0 : i32
    %c0_i32_0 = arith.constant 0 : i32
    %c0_i32_1 = arith.constant 0 : i32
    return %c0_i32, %c0_i32_0 : i32, i32
  }
  func.func @transform_4(%arg0: i32) -> (i32, i32) {
    %c0_i32 = arith.constant 0 : i32
    %c0_i32_0 = arith.constant 0 : i32
    %c0_i32_1 = arith.constant 0 : i32
    return %c0_i32, %c0_i32_0 : i32, i32
  }
  func.func @transform_5(%arg0: i32) -> (i32, i32) {
    %c0_i32 = arith.constant 0 : i32
    %c0_i32_0 = arith.constant 0 : i32
    %c0_i32_1 = arith.constant 0 : i32
    return %c0_i32, %c0_i32_0 : i32, i32
  }
  func.func @transform_6(%arg0: i32) -> (i32, i32, i32) {
    %c0_i32 = arith.constant 0 : i32
    %c0_i32_0 = arith.constant 0 : i32
    %c0_i32_1 = arith.constant 0 : i32
    return %arg0, %c0_i32, %c0_i32_0 : i32, i32, i32
  }
  func.func @transform_7(%arg0: i32) -> (i32, i32) {
    %c0_i32 = arith.constant 0 : i32
    %c0_i32_0 = arith.constant 0 : i32
    %c0_i32_1 = arith.constant 0 : i32
    return %c0_i32, %c0_i32_0 : i32, i32
  }
}

</mosaic_0001>

<llo_original>
// kernel: tpu_custom_call.1
$region0: #{tpu_custom_call.1}
  #allocation0 [shape = 'u32[]', space=smem, size = 0x4, offset = 0x4, fixed_abs, tag = 'smem constant byte address 0x4 - core index']
  #allocation1 [shape = 'u32[144,128]{1,0:T(1,128)}', space=vmem, size = 0x12000, scoped, tag = 'internal scratch']
  #allocation2 [shape = 'f32[16,128]{1,0:T(8,128)}', space=vmem, size = 0x2000, scoped, tag = 'scratch operand']
  #allocation3 [shape = 'f32[8,32]{1,0:T(8,128)}', space=vmem, size = 0x1000, scoped, tag = 'scratch operand']
  #allocation4 [shape = 'f32[8,32]{1,0:T(8,128)}', space=vmem, size = 0x1000, scoped, tag = 'scratch operand']
  %s0 = inlined_call_operand.vmem [shape: f32[64,16], index: 0, kind: input, shape index: {}]
  %s1 = inlined_call_operand.vmem [shape: f32[16,128], index: 1, kind: input, shape index: {}]
  %s2 = inlined_call_operand.vmem [shape: f32[32,128], index: 2, kind: input, shape index: {}]
  %s3 = inlined_call_operand.vmem [shape: f32[1,128], index: 3, kind: input, shape index: {}]
  %s4 = inlined_call_operand.vmem [shape: f32[8,32], index: 4, kind: input, shape index: {}]
  %s5 = inlined_call_operand.vmem [shape: f32[8,32], index: 5, kind: input, shape index: {}]
  %s6 = inlined_call_operand.hbm [shape: f32[8,8,32], index: 6, kind: output, shape index: {0}]
  %s7 = inlined_call_operand.hbm [shape: f32[8,32], index: 7, kind: output, shape index: {1}]
  %8 = xla_tuple %s6, %s7
  %s9 = sld [smem:[#allocation0]]
  $region69: #{tpu_custom_call.1} parent=0
    _
  %s11 = ssub.s32 1, %s9
  %s12 = scalar_select 0, %s11, %s9
  $region1: #{tpu_custom_call.1} parent=0
    #allocation5 [shape = 'u8[16384]{0}', space=vmem, size = 0x4000, scoped, tag = 'output window, operand 0']
    #allocation6 [shape = 's32[2]{0}', space=sflag, size = 0x8, scoped, tag = 'scoped memory for tpu_custom_call.1']
    #allocation7 [shape = 'u8[4096]{0}', space=vmem, size = 0x1000, scoped, tag = 'output window, operand 1, single buffered']
    #allocation8 [shape = 's32[1]{0}', space=sflag, size = 0x4, scoped, tag = 'scoped memory for tpu_custom_call.1']
    %13 = vsyncpa [#allocation6], 0
    %s14 = scalar_lea.sflag [#allocation6], 1
    %15 = vsyncpa %s14, 0
    %16 = vsyncpa [#allocation8], 0
    loop: start=0, step=1, limit=6
    $region2: #{tpu_custom_call.1} parent=1 // loop_pre_header
      _
    $region3: #{tpu_custom_call.1} parent=1 // loop_header
      %s18 = sphi 0, %s22
      %p19 = scmp.ge.s32.totalorder %s18, 6
      %s28 = sphi 0, %s30
      %s31 = sphi 0, %s28
      %s32 = sphi 0, %s31
      %s48 = sphi 0, %s32
      %s52 = sphi 0, %s52
      %s54 = sphi 0, %s52
      %s55 = sphi 0, %s54
      %s69 = sphi 0, %s55
      %s73 = sphi 0, %s73
      %s75 = sphi 0, %s73
      %s76 = sphi 0, %s75
      %s90 = sphi 0, %s76
      %s94 = sphi 0, %s94
      %s96 = sphi 0, %s94
      %s97 = sphi 0, %s96
      %s111 = sphi 0, %s97
      %s115 = sphi 0, %s115
      %s117 = sphi 0, %s115
      %s118 = sphi 0, %s117
      %s132 = sphi 0, %s118
      %s136 = sphi 0, %s136
      %s138 = sphi 0, %s136
      %s139 = sphi 0, %s138
      %s153 = sphi 0, %s139
      %s159 = sphi 0, %s161
      %s162 = sphi 0, %s159
      %s163 = sphi 0, %s162
      %s179 = sphi 0, %s163
      %s183 = sphi 0, %s183
      %s185 = sphi 0, %s183
      %s186 = sphi 0, %s185
      %s200 = sphi 0, %s186
    $region4: #{tpu_custom_call.1} parent=1 // loop_header_branch
      %21 = sbr.rel (%p19) target = $region8
    $region5: #{tpu_custom_call.1} parent=1 // loop_body
      %s23 = ssub.s32 %s18, 1
      %s24 = ssub.s32 %s18, 2
      %s25 = sadd.s32 %s18, 1
      %s26 = ssub.s32 %s18, %s25
      %p27 = scmp.eq.s32.totalorder %s26, 0
      %s29 = sadd.s32 %s28, 1
      %s30 = scalar_select %p27, %s28, %s29
      %p33 = pneg %p27
      %p34 = scmp.eq.s32.totalorder %s18, 3
      %p35 = por %p33, %p34
      %p36 = scmp.ne.s32.totalorder %s28, %s31
      %p37 = scmp.eq.s32.totalorder %s18, 0
      %p38 = por %p36, %p37
      %p39 = scmp.ne.s32.totalorder %s28, %s31
      %p40 = scmp.eq.s32.totalorder %s23, 3
      %p41 = por %p39, %p40
      %p42 = scmp.ne.s32.totalorder %s31, %s32
      %p43 = scmp.eq.s32.totalorder %s23, 0
      %p44 = por %p42, %p43
      %p45 = scmp.ne.s32.totalorder %s31, %s32
      %p46 = scmp.eq.s32.totalorder %s24, 3
      %p47 = por %p45, %p46
      %p49 = scmp.ne.s32.totalorder %s32, %s48
      %p50 = scmp.eq.s32.totalorder %s24, 0
      %p51 = por %p49, %p50
      %s53 = sadd.s32 %s52, 1
      %p56 = scmp.eq.s32.totalorder %s18, 3
      %p57 = scmp.ne.s32.totalorder %s52, %s54
      %p58 = scmp.eq.s32.totalorder %s18, 0
      %p59 = por %p57, %p58
      %p60 = scmp.ne.s32.totalorder %s52, %s54
      %p61 = scmp.eq.s32.totalorder %s23, 3
      %p62 = por %p60, %p61
      %p63 = scmp.ne.s32.totalorder %s54, %s55
      %p64 = scmp.eq.s32.totalorder %s23, 0
      %p65 = por %p63, %p64
      %p66 = scmp.ne.s32.totalorder %s54, %s55
      %p67 = scmp.eq.s32.totalorder %s24, 3
      %p68 = por %p66, %p67
      %p70 = scmp.ne.s32.totalorder %s55, %s69
      %p71 = scmp.eq.s32.totalorder %s24, 0
      %p72 = por %p70, %p71
      %s74 = sadd.s32 %s73, 1
      %p77 = scmp.eq.s32.totalorder %s18, 3
      %p78 = scmp.ne.s32.totalorder %s73, %s75
      %p79 = scmp.eq.s32.totalorder %s18, 0
      %p80 = por %p78, %p79
      %p81 = scmp.ne.s32.totalorder %s73, %s75
      %p82 = scmp.eq.s32.totalorder %s23, 3
      %p83 = por %p81, %p82
      %p84 = scmp.ne.s32.totalorder %s75, %s76
      %p85 = scmp.eq.s32.totalorder %s23, 0
      %p86 = por %p84, %p85
      %p87 = scmp.ne.s32.totalorder %s75, %s76
      %p88 = scmp.eq.s32.totalorder %s24, 3
      %p89 = por %p87, %p88
      %p91 = scmp.ne.s32.totalorder %s76, %s90
      %p92 = scmp.eq.s32.totalorder %s24, 0
      %p93 = por %p91, %p92
      %s95 = sadd.s32 %s94, 1
      %p98 = scmp.eq.s32.totalorder %s18, 3
      %p99 = scmp.ne.s32.totalorder %s94, %s96
      %p100 = scmp.eq.s32.totalorder %s18, 0
      %p101 = por %p99, %p100
      %p102 = scmp.ne.s32.totalorder %s94, %s96
      %p103 = scmp.eq.s32.totalorder %s23, 3
      %p104 = por %p102, %p103
      %p105 = scmp.ne.s32.totalorder %s96, %s97
      %p106 = scmp.eq.s32.totalorder %s23, 0
      %p107 = por %p105, %p106
      %p108 = scmp.ne.s32.totalorder %s96, %s97
      %p109 = scmp.eq.s32.totalorder %s24, 3
      %p110 = por %p108, %p109
      %p112 = scmp.ne.s32.totalorder %s97, %s111
      %p113 = scmp.eq.s32.totalorder %s24, 0
      %p114 = por %p112, %p113
      %s116 = sadd.s32 %s115, 1
      %p119 = scmp.eq.s32.totalorder %s18, 3
      %p120 = scmp.ne.s32.totalorder %s115, %s117
      %p121 = scmp.eq.s32.totalorder %s18, 0
      %p122 = por %p120, %p121
      %p123 = scmp.ne.s32.totalorder %s115, %s117
      %p124 = scmp.eq.s32.totalorder %s23, 3
      %p125 = por %p123, %p124
      %p126 = scmp.ne.s32.totalorder %s117, %s118
      %p127 = scmp.eq.s32.totalorder %s23, 0
      %p128 = por %p126, %p127
      %p129 = scmp.ne.s32.totalorder %s117, %s118
      %p130 = scmp.eq.s32.totalorder %s24, 3
      %p131 = por %p129, %p130
      %p133 = scmp.ne.s32.totalorder %s118, %s132
      %p134 = scmp.eq.s32.totalorder %s24, 0
      %p135 = por %p133, %p134
      %s137 = sadd.s32 %s136, 1
      %p140 = scmp.eq.s32.totalorder %s18, 3
      %p141 = scmp.ne.s32.totalorder %s136, %s138
      %p142 = scmp.eq.s32.totalorder %s18, 0
      %p143 = por %p141, %p142
      %p144 = scmp.ne.s32.totalorder %s136, %s138
      %p145 = scmp.eq.s32.totalorder %s23, 3
      %p146 = por %p144, %p145
      %p147 = scmp.ne.s32.totalorder %s138, %s139
      %p148 = scmp.eq.s32.totalorder %s23, 0
      %p149 = por %p147, %p148
      %p150 = scmp.ne.s32.totalorder %s138, %s139
      %p151 = scmp.eq.s32.totalorder %s24, 3
      %p152 = por %p150, %p151
      %p154 = scmp.ne.s32.totalorder %s139, %s153
      %p155 = scmp.eq.s32.totalorder %s24, 0
      %p156 = por %p154, %p155
      %s157 = ssub.s32 %s18, %s25
      %p158 = scmp.eq.s32.totalorder %s157, 0
      %s160 = sadd.s32 %s159, 1
      %s161 = scalar_select %p158, %s159, %s160
      %p164 = pneg %p158
      %p165 = scmp.eq.s32.totalorder %s18, 3
      %p166 = por %p164, %p165
      %p167 = scmp.ne.s32.totalorder %s159, %s162
      %p168 = scmp.eq.s32.totalorder %s18, 0
      %p169 = por %p167, %p168
      %p170 = scmp.ne.s32.totalorder %s159, %s162
      %p171 = scmp.eq.s32.totalorder %s23, 3
      %p172 = por %p170, %p171
      %p173 = scmp.ne.s32.totalorder %s162, %s163
      %p174 = scmp.eq.s32.totalorder %s23, 0
      %p175 = por %p173, %p174
      %p176 = scmp.ne.s32.totalorder %s162, %s163
      %p177 = scmp.eq.s32.totalorder %s24, 3
      %p178 = por %p176, %p177
      %p180 = scmp.ne.s32.totalorder %s163, %s179
      %p181 = scmp.eq.s32.totalorder %s24, 0
      %p182 = por %p180, %p181
      %s184 = sadd.s32 %s183, 1
      %p187 = scmp.eq.s32.totalorder %s18, 3
      %p188 = scmp.ne.s32.totalorder %s183, %s185
      %p189 = scmp.eq.s32.totalorder %s18, 0
      %p190 = por %p188, %p189
      %p191 = scmp.ne.s32.totalorder %s183, %s185
      %p192 = scmp.eq.s32.totalorder %s23, 3
      %p193 = por %p191, %p192
      %p194 = scmp.ne.s32.totalorder %s185, %s186
      %p195 = scmp.eq.s32.totalorder %s23, 0
      %p196 = por %p194, %p195
      %p197 = scmp.ne.s32.totalorder %s185, %s186
      %p198 = scmp.eq.s32.totalorder %s24, 3
      %p199 = por %p197, %p198
      %p201 = scmp.ne.s32.totalorder %s186, %s200
      %p202 = scmp.eq.s32.totalorder %s24, 0
      %p203 = por %p201, %p202
      %p204 = scmp.le.s32.totalorder 1, %s18
      %p205 = scmp.lt.s32.totalorder %s18, 5
      %p206 = pnand %p204, %p205
      %p207 = pneg %p206
      // Predicated region
      $region9: #{tpu_custom_call.1} parent=5 // pred_check
        _
      $region10: #{tpu_custom_call.1} parent=5 // pred_check_branch
        %209 = sbr.rel (%p206) target = $region12
      $region11: #{tpu_custom_call.1} parent=5 // pred_region
        %s210 = ssub.s32 %s18, 1
        // Predicated region
        $region13: #{tpu_custom_call.1} parent=11 // pred_check
          %p211 = pneg %p65
        $region14: #{tpu_custom_call.1} parent=11 // pred_check_branch
          %213 = sbr.rel (%p211) target = $region16
        $region15: #{tpu_custom_call.1} parent=11 // pred_region
          _
        $region16: #{tpu_custom_call.1} parent=11 // pred_fallthru
          _
        // Predicated region
        $region17: #{tpu_custom_call.1} parent=11 // pred_check
          %p214 = pneg %p86
        $region18: #{tpu_custom_call.1} parent=11 // pred_check_branch
          %216 = sbr.rel (%p214) target = $region20
        $region19: #{tpu_custom_call.1} parent=11 // pred_region
          _
        $region20: #{tpu_custom_call.1} parent=11 // pred_fallthru
          _
        // Predicated region
        $region21: #{tpu_custom_call.1} parent=11 // pred_check
          %p217 = pneg %p107
        $region22: #{tpu_custom_call.1} parent=11 // pred_check_branch
          %219 = sbr.rel (%p217) target = $region24
        $region23: #{tpu_custom_call.1} parent=11 // pred_region
          _
        $region24: #{tpu_custom_call.1} parent=11 // pred_fallthru
          _
        // Predicated region
        $region25: #{tpu_custom_call.1} parent=11 // pred_check
          %p220 = pneg %p128
        $region26: #{tpu_custom_call.1} parent=11 // pred_check_branch
          %222 = sbr.rel (%p220) target = $region28
        $region27: #{tpu_custom_call.1} parent=11 // pred_region
          _
        $region28: #{tpu_custom_call.1} parent=11 // pred_fallthru
          _
        // Predicated region
        $region29: #{tpu_custom_call.1} parent=11 // pred_check
          %p223 = pneg %p149
        $region30: #{tpu_custom_call.1} parent=11 // pred_check_branch
          %225 = sbr.rel (%p223) target = $region32
        $region31: #{tpu_custom_call.1} parent=11 // pred_region
          _
        $region32: #{tpu_custom_call.1} parent=11 // pred_fallthru
          _
      $region12: #{tpu_custom_call.1} parent=5 // pred_fallthru
        _
      %p226 = scmp.lt.s32.totalorder %s18, 4
      // Predicated region
      $region33: #{tpu_custom_call.1} parent=5 // pred_check
        %p227 = pneg %p226
      $region34: #{tpu_custom_call.1} parent=5 // pred_check_branch
        %229 = sbr.rel (%p227) target = $region36
      $region35: #{tpu_custom_call.1} parent=5 // pred_region
        // Predicated region
        $region37: #{tpu_custom_call.1} parent=35 // pred_check
          %p230 = pneg %p38
        $region38: #{tpu_custom_call.1} parent=35 // pred_check_branch
          %232 = sbr.rel (%p230) target = $region40
        $region39: #{tpu_custom_call.1} parent=35 // pred_region
          %s233 = smul.u32 2, %s18
          %p234 = scmp.lt.s32.totalorder %s233, 7
          %s235 = scalar_select %p234, %s233, 7
          %s236 = smul.addr %s235, 8
          %s237 = scalar_lea.vmem %s0, %s236
          %s238 = smul.u32 2, %s18
        $region40: #{tpu_custom_call.1} parent=35 // pred_fallthru
          _
      $region36: #{tpu_custom_call.1} parent=5 // pred_fallthru
        _
      %p239 = scmp.le.s32.totalorder 1, %s18
      %p240 = scmp.lt.s32.totalorder %s18, 5
      %p241 = pnand %p239, %p240
      %p242 = pneg %p241
      // Predicated region
      $region41: #{tpu_custom_call.1} parent=5 // pred_check
        _
      $region42: #{tpu_custom_call.1} parent=5 // pred_check_branch
        %244 = sbr.rel (%p241) target = $region44
      $region43: #{tpu_custom_call.1} parent=5 // pred_region
        %s245 = ssub.s32 %s18, 1
        %s246 = smul.u32 2, %s23
        %p247 = scmp.lt.s32.totalorder %s246, 7
        %s248 = scalar_select %p247, %s246, 7
        %s249 = smul.addr %s248, 8
        %s250 = scalar_lea.vmem %s0, %s249
        %p251 = pneg %p44
        %p252 = pneg %p41
        %p253 = pneg %p65
        %p254 = pneg %p62
        %p255 = pneg %p86
        %p256 = pneg %p83
        %p257 = pneg %p107
        %p258 = pneg %p104
        %p259 = pneg %p128
        %p260 = pneg %p125
        %p261 = pneg %p149
        %p262 = pneg %p146
        %p263 = pneg %p175
        %p264 = pneg %p172
        %s265 = sand.u32 %s162, 1
        %s266 = scalar_lea.sflag [#allocation6], %s265
        %s267 = sand.u32 %s162, 1
        %s268 = smul.addr %s267, 16
        %s269 = scalar_lea.vmem [#allocation5], %s268
        %p270 = pneg %p196
        %p271 = pneg %p193
        %s272 = smul.u32 2, %s23
        %p273 = scmp.lt.s32.totalorder %s272, 7
        %s274 = scalar_select %p273, %s272, 7
        %s275 = smul.addr %s274, 8
        %s276 = scalar_lea.vmem %s0, %s275
        %s277 = smul.u32 2, %s23
        %s278 = smul.u32 2, %s23
        %p279 = scmp.eq.s32.totalorder %s23, 0
        // Predicated region
        $region45: #{tpu_custom_call.1} parent=43 // pred_check
          %p280 = pneg %p279
        $region46: #{tpu_custom_call.1} parent=43 // pred_check_branch
          %282 = sbr.rel (%p280) target = $region48
        $region47: #{tpu_custom_call.1} parent=43 // pred_region
          %v283 = vld [vmem:[%s4] sm:$0xff]
          %vm284 = vcmask 261120
          %285 = vst.msk [vmem:[#allocation3] sm:$0xff] %vm284, %v283
          %v286 = vld [vmem:[%s5] sm:$0xff]
          %287 = vst.msk [vmem:[#allocation4] sm:$0xff] %vm284, %v286
        $region48: #{tpu_custom_call.1} parent=43 // pred_fallthru
          _
        %v288 = vld [vmem:[%s276] sm:$0xff]
        %v289 = vld [vmem:[%s276 + $0x8] sm:$0xff]
        %v290 = vld [vmem:[%s1] sm:$0xff]
        %v291 = vld [vmem:[%s1 + $0x8] sm:$0xff]
        %v292 = vld [vmem:[%s3] sm:$0x1]
        %v294 = vlaneseq
        %v295 = vshrl.u32 %v294, 7
        %v296 = vsub.s32 0, %v295
        %v297 = vrot.slane %v292, %v296
        %vm299 = vcmask 130048
        %v301 = vsel %vm299, %v288, 0
        %v304 = vsel %vm299, %v289, 0
        %306 = vmatprep.subr.mxu0 0.0
        %307 = vmatpush1.msra.mxu0 %v290
        %308 = vmatprep.subr.mxu0 0.0
        %309 = vmatpush1.msra.mxu0 %v291
        %310 = vmatprep.subr.mxu0 0.0
        %311 = vmatpush1.msra.mxu0 0.0
        %312 = vmatprep.subr.mxu0 0.0
        %313 = vmatpush1.msra.mxu0 0.0
        %314 = vmatprep.subr.mxu0 0.0
        %315 = vmatpush1.msra.mxu0 0.0
        %316 = vmatprep.subr.mxu0 0.0
        %317 = vmatpush1.msra.mxu0 0.0
        %318 = vmatprep.subr.mxu0 0.0
        %319 = vmatpush1.msra.mxu0 0.0
        %320 = vmatprep.subr.mxu0 0.0
        %321 = vmatpush1.msra.mxu0 0.0
        %322 = vmatprep.subr.mxu0 0.0
        %323 = vmatpush1.msra.mxu0 0.0
        %324 = vmatprep.subr.mxu0 0.0
        %325 = vmatpush1.msra.mxu0 0.0
        %326 = vmatprep.subr.mxu0 0.0
        %327 = vmatpush1.msra.mxu0 0.0
        %328 = vmatprep.subr.mxu0 0.0
        %329 = vmatpush1.msra.mxu0 0.0
        %330 = vmatprep.subr.mxu0 0.0
        %331 = vmatpush1.msra.mxu0 0.0
        %332 = vmatprep.subr.mxu0 0.0
        %333 = vmatpush1.msra.mxu0 0.0
        %334 = vmatprep.subr.mxu0 0.0
        %335 = vmatpush1.msra.mxu0 0.0
        %336 = vmatprep.subr.mxu0 0.0
        %337 = vmatpush1.msra.mxu0 0.0
        %338 = vmatprep.subr.mxu0 0.0
        %339 = vmatpush1.msra.mxu0 0.0
        %340 = vmatprep.subr.mxu0 0.0
        %341 = vmatpush1.msra.mxu0 0.0
        %342 = vmatprep.subr.mxu0 0.0
        %343 = vmatpush1.msra.mxu0 0.0
        %344 = vmatprep.subr.mxu0 0.0
        %345 = vmatpush1.msra.mxu0 0.0
        %346 = vmatprep.subr.mxu0 0.0
        %347 = vmatpush1.msra.mxu0 0.0
        %348 = vmatprep.subr.mxu0 0.0
        %349 = vmatpush1.msra.mxu0 0.0
        %350 = vmatprep.subr.mxu0 0.0
        %351 = vmatpush1.msra.mxu0 0.0
        %352 = vmatprep.subr.mxu0 0.0
        %353 = vmatpush1.msra.mxu0 0.0
        %354 = vmatprep.subr.mxu0 0.0
        %355 = vmatpush1.msra.mxu0 0.0
        %356 = vmatprep.subr.mxu0 0.0
        %357 = vmatpush1.msra.mxu0 0.0
        %358 = vmatprep.subr.mxu0 0.0
        %359 = vmatpush1.msra.mxu0 0.0
        %360 = vmatprep.subr.mxu0 0.0
        %361 = vmatpush1.msra.mxu0 0.0
        %362 = vmatprep.subr.mxu0 0.0
        %363 = vmatpush1.msra.mxu0 0.0
        %364 = vmatprep.subr.mxu0 0.0
        %365 = vmatpush1.msra.mxu0 0.0
        %366 = vmatprep.subr.mxu0 0.0
        %367 = vmatpush1.msra.mxu0 0.0
        %368 = vmatprep.subr.mxu0 0.0
        %369 = vmatpush1.msra.mxu0 0.0
        %370 = vmatprep.mubr.f32.mxu0 0.0
        %371 = vmatmul.mubr.f32.gmra.mrb[0].mxu0 %v301
        %v372 = vpop.f32.mrb[0].mxu0
        %v373 = vadd.f32 %v297, %v372
        %v374 = vpop.f32.mrb[0].mxu0
        %375 = vmatprep.mubr.f32.mxu0 0.0
        %376 = vmatmul.mubr.f32.gmra.mrb[0].mxu0 %v304
        %v377 = vpop.f32.mrb[0].mxu0
        %v378 = vadd.f32 %v297, %v377
        %v379 = vpop.f32.mrb[0].mxu0
        %380 = vdwg.mxu0
        %381 = vst [vmem:[#allocation2] sm:$0xff] %v373
        %382 = vst [vmem:[#allocation2 + $0x8] sm:$0xff] %v378
        %v383 = vld [vmem:[#allocation3] sm:$0xff]
        %v384 = vld [vmem:[#allocation4] sm:$0xff]
        %v385 = vld [vmem:[#allocation2] sm:$0xff]
        %v386 = vld [vmem:[%s2] sm:$0xff]
        %v387 = vld [vmem:[%s2 + $0x8] sm:$0xff]
        %v388 = vld [vmem:[%s2 + $0x10] sm:$0xff]
        %v389 = vld [vmem:[%s2 + $0x18] sm:$0xff]
        %vm390 = vcmask 261120
        %v392 = vsel %vm390, %v383, 0
        %394 = vmatprep.subr.mxu0 0.0
        %395 = vmatpush1.msra.mxu0 %v386
        %396 = vmatprep.subr.mxu0 0.0
        %397 = vmatpush1.msra.mxu0 %v387
        %398 = vmatprep.subr.mxu0 0.0
        %399 = vmatpush1.msra.mxu0 %v388
        %400 = vmatprep.subr.mxu0 0.0
        %401 = vmatpush1.msra.mxu0 %v389
        %402 = vmatprep.subr.mxu0 0.0
        %403 = vmatpush1.msra.mxu0 0.0
        %404 = vmatprep.subr.mxu0 0.0
        %405 = vmatpush1.msra.mxu0 0.0
        %406 = vmatprep.subr.mxu0 0.0
        %407 = vmatpush1.msra.mxu0 0.0
        %408 = vmatprep.subr.mxu0 0.0
        %409 = vmatpush1.msra.mxu0 0.0
        %410 = vmatprep.subr.mxu0 0.0
        %411 = vmatpush1.msra.mxu0 0.0
        %412 = vmatprep.subr.mxu0 0.0
        %413 = vmatpush1.msra.mxu0 0.0
        %414 = vmatprep.subr.mxu0 0.0
        %415 = vmatpush1.msra.mxu0 0.0
        %416 = vmatprep.subr.mxu0 0.0
        %417 = vmatpush1.msra.mxu0 0.0
        %418 = vmatprep.subr.mxu0 0.0
        %419 = vmatpush1.msra.mxu0 0.0
        %420 = vmatprep.subr.mxu0 0.0
        %421 = vmatpush1.msra.mxu0 0.0
        %422 = vmatprep.subr.mxu0 0.0
        %423 = vmatpush1.msra.mxu0 0.0
        %424 = vmatprep.subr.mxu0 0.0
        %425 = vmatpush1.msra.mxu0 0.0
        %426 = vmatprep.subr.mxu0 0.0
        %427 = vmatpush1.msra.mxu0 0.0
        %428 = vmatprep.subr.mxu0 0.0
        %429 = vmatpush1.msra.mxu0 0.0
        %430 = vmatprep.subr.mxu0 0.0
        %431 = vmatpush1.msra.mxu0 0.0
        %432 = vmatprep.subr.mxu0 0.0
        %433 = vmatpush1.msra.mxu0 0.0
        %434 = vmatprep.subr.mxu0 0.0
        %435 = vmatpush1.msra.mxu0 0.0
        %436 = vmatprep.subr.mxu0 0.0
        %437 = vmatpush1.msra.mxu0 0.0
        %438 = vmatprep.subr.mxu0 0.0
        %439 = vmatpush1.msra.mxu0 0.0
        %440 = vmatprep.subr.mxu0 0.0
        %441 = vmatpush1.msra.mxu0 0.0
        %442 = vmatprep.subr.mxu0 0.0
        %443 = vmatpush1.msra.mxu0 0.0
        %444 = vmatprep.subr.mxu0 0.0
        %445 = vmatpush1.msra.mxu0 0.0
        %446 = vmatprep.subr.mxu0 0.0
        %447 = vmatpush1.msra.mxu0 0.0
        %448 = vmatprep.subr.mxu0 0.0
        %449 = vmatpush1.msra.mxu0 0.0
        %450 = vmatprep.subr.mxu0 0.0
        %451 = vmatpush1.msra.mxu0 0.0
        %452 = vmatprep.subr.mxu0 0.0
        %453 = vmatpush1.msra.mxu0 0.0
        %454 = vmatprep.subr.mxu0 0.0
        %455 = vmatpush1.msra.mxu0 0.0
        %456 = vmatprep.subr.mxu0 0.0
        %457 = vmatpush1.msra.mxu0 0.0
        %458 = vmatprep.mubr.f32.mxu0 0.0
        %459 = vmatmul.mubr.f32.gmra.mrb[0].mxu0 %v392
        %v460 = vpop.f32.mrb[0].mxu0
        %v461 = vadd.f32 0.0, %v460
        %v462 = vpop.f32.mrb[0].mxu0
        %463 = vdwg.mxu0
        %v464 = vadd.f32 %v385, %v461
        %v465 = vxor.u32 %v464, 2147483648
        %v466 = vmul.f32 %v465, 1.442695
        %v467 = vpow.pop %v466
        %v468 = vadd.f32 %v467, 1.0
        %v469 = vrcp.pop %v468
        %v470 = vmul.f32 1.0, %v469
        %v471 = vtanh.pop %v464
        %473 = vrot.lane.b32.xlu0 %v384, 32
        %v474 = vpop.permute.xlu0 %473
        %v476 = vmul.f32 %v470, %v474
        %478 = vrot.lane.b32.xlu0 %v471, 32
        %v479 = vpop.permute.xlu0 %478
        %v481 = vmul.f32 %v470, %v479
        %483 = vrot.lane.b32.xlu0 %v481, 32
        %v484 = vpop.permute.xlu0 %483
        %v486 = vadd.f32 %v476, %v484
        %v487 = vtanh.pop %v486
        %489 = vrot.lane.b32.xlu0 %v487, 32
        %v490 = vpop.permute.xlu0 %489
        %v492 = vmul.f32 %v470, %v490
        %494 = vrot.lane.b32.xlu0 %v492, 64
        %v495 = vpop.permute.xlu0 %494
        %497 = vst.msk [vmem:[%s269] sm:$0xff] %vm390, %v495
        %s498 = scalar_lea.vmem [#allocation2], 8
        %v499 = vld [vmem:[%s498] sm:$0xff]
        %v500 = vld [vmem:[%s2] sm:$0xff]
        %v501 = vld [vmem:[%s2 + $0x8] sm:$0xff]
        %v502 = vld [vmem:[%s2 + $0x10] sm:$0xff]
        %v503 = vld [vmem:[%s2 + $0x18] sm:$0xff]
        %v504 = vsel %vm390, %v495, 0
        %506 = vmatprep.subr.mxu0 0.0
        %507 = vmatpush1.msra.mxu0 %v500
        %508 = vmatprep.subr.mxu0 0.0
        %509 = vmatpush1.msra.mxu0 %v501
        %510 = vmatprep.subr.mxu0 0.0
        %511 = vmatpush1.msra.mxu0 %v502
        %512 = vmatprep.subr.mxu0 0.0
        %513 = vmatpush1.msra.mxu0 %v503
        %514 = vmatprep.subr.mxu0 0.0
        %515 = vmatpush1.msra.mxu0 0.0
        %516 = vmatprep.subr.mxu0 0.0
        %517 = vmatpush1.msra.mxu0 0.0
        %518 = vmatprep.subr.mxu0 0.0
        %519 = vmatpush1.msra.mxu0 0.0
        %520 = vmatprep.subr.mxu0 0.0
        %521 = vmatpush1.msra.mxu0 0.0
        %522 = vmatprep.subr.mxu0 0.0
        %523 = vmatpush1.msra.mxu0 0.0
        %524 = vmatprep.subr.mxu0 0.0
        %525 = vmatpush1.msra.mxu0 0.0
        %526 = vmatprep.subr.mxu0 0.0
        %527 = vmatpush1.msra.mxu0 0.0
        %528 = vmatprep.subr.mxu0 0.0
        %529 = vmatpush1.msra.mxu0 0.0
        %530 = vmatprep.subr.mxu0 0.0
        %531 = vmatpush1.msra.mxu0 0.0
        %532 = vmatprep.subr.mxu0 0.0
        %533 = vmatpush1.msra.mxu0 0.0
        %534 = vmatprep.subr.mxu0 0.0
        %535 = vmatpush1.msra.mxu0 0.0
        %536 = vmatprep.subr.mxu0 0.0
        %537 = vmatpush1.msra.mxu0 0.0
        %538 = vmatprep.subr.mxu0 0.0
        %539 = vmatpush1.msra.mxu0 0.0
        %540 = vmatprep.subr.mxu0 0.0
        %541 = vmatpush1.msra.mxu0 0.0
        %542 = vmatprep.subr.mxu0 0.0
        %543 = vmatpush1.msra.mxu0 0.0
        %544 = vmatprep.subr.mxu0 0.0
        %545 = vmatpush1.msra.mxu0 0.0
        %546 = vmatprep.subr.mxu0 0.0
        %547 = vmatpush1.msra.mxu0 0.0
        %548 = vmatprep.subr.mxu0 0.0
        %549 = vmatpush1.msra.mxu0 0.0
        %550 = vmatprep.subr.mxu0 0.0
        %551 = vmatpush1.msra.mxu0 0.0
        %552 = vmatprep.subr.mxu0 0.0
        %553 = vmatpush1.msra.mxu0 0.0
        %554 = vmatprep.subr.mxu0 0.0
        %555 = vmatpush1.msra.mxu0 0.0
        %556 = vmatprep.subr.mxu0 0.0
        %557 = vmatpush1.msra.mxu0 0.0
        %558 = vmatprep.subr.mxu0 0.0
        %559 = vmatpush1.msra.mxu0 0.0
        %560 = vmatprep.subr.mxu0 0.0
        %561 = vmatpush1.msra.mxu0 0.0
        %562 = vmatprep.subr.mxu0 0.0
        %563 = vmatpush1.msra.mxu0 0.0
        %564 = vmatprep.subr.mxu0 0.0
        %565 = vmatpush1.msra.mxu0 0.0
        %566 = vmatprep.subr.mxu0 0.0
        %567 = vmatpush1.msra.mxu0 0.0
        %568 = vmatprep.subr.mxu0 0.0
        %569 = vmatpush1.msra.mxu0 0.0
        %570 = vmatprep.mubr.f32.mxu0 0.0
        %571 = vmatmul.mubr.f32.gmra.mrb[0].mxu0 %v504
        %v572 = vpop.f32.mrb[0].mxu0
        %v573 = vadd.f32 0.0, %v572
        %v574 = vpop.f32.mrb[0].mxu0
        %575 = vdwg.mxu0
        %v576 = vadd.f32 %v499, %v573
        %v577 = vxor.u32 %v576, 2147483648
        %v578 = vmul.f32 %v577, 1.442695
        %v579 = vpow.pop %v578
        %v580 = vadd.f32 %v579, 1.0
        %v581 = vrcp.pop %v580
        %v582 = vmul.f32 1.0, %v581
        %v583 = vtanh.pop %v576
        %v584 = vmul.f32 %v582, %v486
        %586 = vrot.lane.b32.xlu0 %v583, 32
        %v587 = vpop.permute.xlu0 %586
        %v589 = vmul.f32 %v582, %v587
        %591 = vrot.lane.b32.xlu0 %v589, 32
        %v592 = vpop.permute.xlu0 %591
        %v594 = vadd.f32 %v584, %v592
        %v595 = vtanh.pop %v594
        %597 = vrot.lane.b32.xlu0 %v595, 32
        %v598 = vpop.permute.xlu0 %597
        %v600 = vmul.f32 %v582, %v598
        %602 = vrot.lane.b32.xlu0 %v600, 64
        %v603 = vpop.permute.xlu0 %602
        %s605 = scalar_lea.vmem %s269, 8 [#allocation5]
        %606 = vst.msk [vmem:[%s605] sm:$0xff] %vm390, %v603
        %607 = vst.msk [vmem:[#allocation3] sm:$0xff] %vm390, %v603
        %609 = vrot.lane.b32.xlu0 %v594, 96
        %v610 = vpop.permute.xlu0 %609
        %612 = vst.msk [vmem:[#allocation4] sm:$0xff] %vm390, %v610
        %613 = vst.msk [vmem:[#allocation7] sm:$0xff] %vm390, %v610
        %s614 = sand.u32 %s162, 1
        %s615 = scalar_lea.sflag [#allocation6], %s614
        %s616 = sand.u32 %s162, 1
        %s617 = smul.addr %s616, 16
        %s618 = scalar_lea.vmem [#allocation5], %s617
        // Predicated region
        $region49: #{tpu_custom_call.1} parent=43 // pred_check
          %p619 = pneg %p172
        $region50: #{tpu_custom_call.1} parent=43 // pred_check_branch
          %621 = sbr.rel (%p619) target = $region52
        $region51: #{tpu_custom_call.1} parent=43 // pred_region
          %s622 = smul.u32 2, %s23
          %s624 = ssub.s32 256, 256
          %625 = vsyncadd %s615, %s624
          %s626 = smul.addr %s622, 128
          %s627 = scalar_lea.hbm %s6, %s626
          %s628 = sshll.u32 %s618, 4
          %s629 = int_to_ptr.vmem [resolvable:$true] %s628
          %634 = dma.vmem_to_hbm [thread:$0]  %s629, 256, %s627, %s615, 128, 128, 8
        $region52: #{tpu_custom_call.1} parent=43 // pred_fallthru
          _
        // Predicated region
        $region53: #{tpu_custom_call.1} parent=43 // pred_check
          %p635 = pneg %p193
        $region54: #{tpu_custom_call.1} parent=43 // pred_check_branch
          %637 = sbr.rel (%p635) target = $region56
        $region55: #{tpu_custom_call.1} parent=43 // pred_region
          %s639 = ssub.s32 128, 128
          %640 = vsyncadd [#allocation8], %s639
          %s642 = sshll.u32 [#allocation7], 4
          %s643 = int_to_ptr.vmem [resolvable:$true] %s642
          %645 = dma.vmem_to_hbm [thread:$0]  %s643, 128, %s7, [#allocation8]
        $region56: #{tpu_custom_call.1} parent=43 // pred_fallthru
          _
        // Predicated region
        $region57: #{tpu_custom_call.1} parent=43 // pred_check
          %p646 = pneg %p193
        $region58: #{tpu_custom_call.1} parent=43 // pred_check_branch
          %648 = sbr.rel (%p646) target = $region60
        $region59: #{tpu_custom_call.1} parent=43 // pred_region
          %649 = dma.done [#allocation8], 128
        $region60: #{tpu_custom_call.1} parent=43 // pred_fallthru
          _
      $region44: #{tpu_custom_call.1} parent=5 // pred_fallthru
        _
      %p650 = scmp.le.s32.totalorder 2, %s18
      // Predicated region
      $region61: #{tpu_custom_call.1} parent=5 // pred_check
        %p651 = pneg %p650
      $region62: #{tpu_custom_call.1} parent=5 // pred_check_branch
        %653 = sbr.rel (%p651) target = $region64
      $region63: #{tpu_custom_call.1} parent=5 // pred_region
        %s654 = ssub.s32 %s18, 2
        // Predicated region
        $region65: #{tpu_custom_call.1} parent=63 // pred_check
          %p655 = pneg %p178
        $region66: #{tpu_custom_call.1} parent=63 // pred_check_branch
          %657 = sbr.rel (%p655) target = $region68
        $region67: #{tpu_custom_call.1} parent=63 // pred_region
          %s658 = sand.u32 %s163, 1
          %s659 = scalar_lea.sflag [#allocation6], %s658
          %s660 = sand.u32 %s163, 1
          %s661 = smul.addr %s660, 16
          %s662 = scalar_lea.vmem [#allocation5], %s661
          %663 = dma.done %s659, 256
        $region68: #{tpu_custom_call.1} parent=63 // pred_fallthru
          _
      $region64: #{tpu_custom_call.1} parent=5 // pred_fallthru
        _
    $region6: #{tpu_custom_call.1} parent=1 // loop_footer
      %s22 = sadd.s32 1, %s18
    $region7: #{tpu_custom_call.1} parent=1 // loop_footer_branch
      %17 = sbr.rel target = $region3
    $region8: #{tpu_custom_call.1} parent=1 // loop_exit
      _
    %664 = vsyncpa [#allocation6], 1
    %s665 = scalar_lea.sflag [#allocation6], 1
    %666 = vsyncpa %s665, 1
    %667 = vsyncpa [#allocation8], 1

</llo_original>
